<compile_context>
chip_gen: v6e
topology: v6e:2x2x1
jax: 0.10.0
libtpu: 0.0.40
codegen_flags: <defaults>
</compile_context>

<pallas_src>
import functools

import jax
import jax.numpy as jnp
from jax.experimental import pallas as pl
from jax.experimental.pallas import tpu as pltpu

_LANE = 128
_SUBLANE = 8
_TARGET_TILE_BYTES = 4 << 20   # ~4 MiB per image slab (review: v7x/v6e sweet spot)
_VMEM_LIMIT_BYTES = 32 << 20   # 2x(in) + 2x(out) 4 MiB buffers + tables << 32 MiB


def _cdiv(a, b):
    return -(-a // b)


def _round_up(x, m):
    return _cdiv(x, m) * m


def _round_down(x, m):
    return (x // m) * m


def _normalize_kernel(x_ref, scale_ref, bias_ref, o_ref, *, br):
    # x_ref/o_ref: (br, bc) image slab. scale_ref/bias_ref: full (rows_pad, 1)
    # per-row tables, VMEM-resident (constant index_map => DMA'd once).
    r0 = pl.multiple_of(pl.program_id(0) * br, br)
    s = scale_ref[pl.ds(r0, br), :]      # (br, 1), broadcast across lanes
    b = bias_ref[pl.ds(r0, br), :]
    x = x_ref[...].astype(jnp.float32)
    o_ref[...] = (x * s + b).astype(o_ref.dtype)


def _choose_tiles(rows, cols, itemsize, target_tile_bytes=_TARGET_TILE_BYTES):
    """Pick a lane-dense (br, bc) block of ~target_tile_bytes with near-equal splits."""
    # Column (lane) block: prefer the full row width (one contiguous DMA per
    # tile, no trailing column block); otherwise near-equal multiples of 128.
    if cols < _LANE:
        bc = cols  # full extent is always legal
    else:
        bc_cap = max(_LANE,
                     _round_down(target_tile_bytes // (itemsize * _SUBLANE), _LANE))
        if cols <= bc_cap:
            bc = cols
        else:
            n_col = _cdiv(cols, bc_cap)
            bc = min(_round_up(_cdiv(cols, n_col), _LANE), bc_cap)

    # Row (sublane) block: fill the remaining byte budget with near-equal
    # multiples of 8 (or the full extent when it already fits).
    if rows <= _SUBLANE:
        br = rows
    else:
        br_cap = max(_SUBLANE,
                     _round_down(target_tile_bytes // (itemsize * bc), _SUBLANE))
        if rows <= br_cap:
            br = rows
        else:
            n_row = _cdiv(rows, br_cap)
            br = min(_round_up(_cdiv(rows, n_row), _SUBLANE), br_cap)
    return br, bc


def normalization(img, mean, std):
    """img: f32[N, C, H, W]; mean, std: f32[C]. Returns (img - mean[c]) / std[c]."""
    N, C, H, W = img.shape
    rows = N * C
    cols = H * W
    itemsize = jnp.dtype(img.dtype).itemsize

    # Lane-dense 2D view: row r corresponds to (n, c) = divmod(r, C).
    x2 = img.reshape(rows, cols)

    br, bc = _choose_tiles(rows, cols, itemsize)

    # v7x has two TensorCores: make sure a non-trivial problem produces at
    # least two (roughly equal) tiles so both cores get work.
    if _cdiv(rows, br) * _cdiv(cols, bc) < 2 and rows * cols * itemsize >= (2 << 20):
        if cols >= 2 * _LANE:
            bc = _round_up(_cdiv(cols, 2), _LANE)
        elif rows > _SUBLANE:
            br = max(_SUBLANE, _round_up(_cdiv(rows, 2), _SUBLANE))

    grid_rows = _cdiv(rows, br)
    grid_cols = _cdiv(cols, bc)
    rows_pad = grid_rows * br

    # Per-row FMA constants: out = x * (1/std) + (-mean/std); row r -> channel r % C.
    scale_rows = jnp.tile((1.0 / std).astype(jnp.float32), N)
    bias_rows = jnp.tile((-mean / std).astype(jnp.float32), N)
    if rows_pad > rows:
        pad = rows_pad - rows
        scale_rows = jnp.pad(scale_rows, (0, pad), constant_values=1.0)
        bias_rows = jnp.pad(bias_rows, (0, pad), constant_values=0.0)
    scale_rows = scale_rows.reshape(rows_pad, 1)
    bias_rows = bias_rows.reshape(rows_pad, 1)

    kernel = functools.partial(_normalize_kernel, br=br)

    grid_spec = pltpu.PrefetchScalarGridSpec(
        num_scalar_prefetch=0,
        grid=(grid_rows, grid_cols),
        in_specs=[
            pl.BlockSpec((br, bc), lambda i, j: (i, j)),        # image slab
            pl.BlockSpec((rows_pad, 1), lambda i, j: (0, 0)),   # resident scale table
            pl.BlockSpec((rows_pad, 1), lambda i, j: (0, 0)),   # resident bias table
        ],
        out_specs=pl.BlockSpec((br, bc), lambda i, j: (i, j)),
    )

    out2 = pl.pallas_call(
        kernel,
        out_shape=jax.ShapeDtypeStruct((rows, cols), img.dtype),
        grid_spec=grid_spec,
        compiler_params=pltpu.CompilerParams(
            dimension_semantics=("parallel", "parallel"),
            vmem_limit_bytes=_VMEM_LIMIT_BYTES,
        ),
        cost_estimate=pl.CostEstimate(
            flops=2 * rows * cols,
            transcendentals=0,
            bytes_accessed=2 * rows * cols * itemsize + 8 * rows,
        ),
    )(x2, scale_rows, bias_rows)

    return out2.reshape(N, C, H, W)


if __name__ == "__main__":
    # Buffers matching the PyTorch module's registered buffers.
    mean = jnp.array([0.485, 0.456, 0.406], dtype=jnp.float32)
    std = jnp.array([0.229, 0.224, 0.225], dtype=jnp.float32)

    # Small NCHW image batch with 3 channels, as the forward() implies.
    key = jax.random.PRNGKey(0)
    img = jax.random.uniform(key, (2, 3, 16, 16), dtype=jnp.float32)

    out = jax.block_until_ready(normalization(img, mean, std))

    # Reference check in plain JAX (original (x - mean) / std formulation).
    ref = (img - mean.reshape(1, 3, 1, 1)) / std.reshape(1, 3, 1, 1)
    assert out.shape == img.shape and out.dtype == img.dtype
    assert jnp.allclose(out, ref, atol=1e-5, rtol=1e-5)

    print("KERNEL_OK")
</pallas_src>

<mosaic_0001>
module attributes {stable_mosaic.version = 11 : i64} {
  func.func @_normalize_kernel(%arg0: i32, %arg1: i32, %arg2: memref<6x256xf32, #tpu.memory_space<vmem>>, %arg3: memref<6x1xf32, #tpu.memory_space<vmem>>, %arg4: memref<6x1xf32, #tpu.memory_space<vmem>>, %arg5: memref<6x256xf32, #tpu.memory_space<vmem>>) attributes {dimension_semantics = [#tpu.dimension_semantics<parallel>, #tpu.dimension_semantics<parallel>], iteration_bounds = array<i64: 1, 1>, scalar_prefetch = 0 : i64, scratch_operands = 0 : i64, tpu.core_type = #tpu.core_type<tc>, window_params = [{transform_indices = @transform_0, window_bounds = array<i64: 6, 256>}, {pipeline_mode = #tpu.pipeline_mode<synchronous>, transform_indices = @transform_1, window_bounds = array<i64: 6, 1>}, {pipeline_mode = #tpu.pipeline_mode<synchronous>, transform_indices = @transform_2, window_bounds = array<i64: 6, 1>}, {transform_indices = @transform_3, window_bounds = array<i64: 6, 256>}]} {
    %c6_i32 = arith.constant 6 : i32
    %0 = arith.muli %arg0, %c6_i32 : i32
    %1 = tpu.assume_multiple %0, 6 : i32
    %2 = arith.index_cast %1 : i32 to index
    %c0 = arith.constant 0 : index
    %3 = vector.load %arg3[%2, %c0] : memref<6x1xf32, #tpu.memory_space<vmem>>, vector<6x1xf32>
    %4 = arith.index_cast %1 : i32 to index
    %c0_0 = arith.constant 0 : index
    %5 = vector.load %arg4[%4, %c0_0] : memref<6x1xf32, #tpu.memory_space<vmem>>, vector<6x1xf32>
    %c0_1 = arith.constant 0 : index
    %c0_2 = arith.constant 0 : index
    %6 = vector.load %arg2[%c0_1, %c0_2] : memref<6x256xf32, #tpu.memory_space<vmem>>, vector<6x256xf32>
    %7 = vector.broadcast %3 : vector<6x1xf32> to vector<6x256xf32>
    %8 = arith.mulf %6, %7 : vector<6x256xf32>
    %9 = vector.broadcast %5 : vector<6x1xf32> to vector<6x256xf32>
    %10 = arith.addf %8, %9 : vector<6x256xf32>
    %c0_3 = arith.constant 0 : index
    %c0_4 = arith.constant 0 : index
    %11 = vector.load %arg5[%c0_3, %c0_4] : memref<6x256xf32, #tpu.memory_space<vmem>>, vector<6x256xf32>
    tpu.vector_store %arg5[%c0_3, %c0_4], %10 {strides = array<i32>} : memref<6x256xf32, #tpu.memory_space<vmem>>, vector<6x256xf32>,
    return
  }
  func.func @transform_0(%arg0: i32, %arg1: i32) -> (i32, i32) {
    %c0_i32 = arith.constant 0 : i32
    return %arg0, %arg1 : i32, i32
  }
  func.func @transform_1(%arg0: i32, %arg1: i32) -> (i32, i32) {
    %c0_i32 = arith.constant 0 : i32
    %c0_i32_0 = arith.constant 0 : i32
    %c0_i32_1 = arith.constant 0 : i32
    return %c0_i32, %c0_i32_0 : i32, i32
  }
  func.func @transform_2(%arg0: i32, %arg1: i32) -> (i32, i32) {
    %c0_i32 = arith.constant 0 : i32
    %c0_i32_0 = arith.constant 0 : i32
    %c0_i32_1 = arith.constant 0 : i32
    return %c0_i32, %c0_i32_0 : i32, i32
  }
  func.func @transform_3(%arg0: i32, %arg1: i32) -> (i32, i32) {
    %c0_i32 = arith.constant 0 : i32
    return %arg0, %arg1 : i32, i32
  }
}

</mosaic_0001>

<llo_original>
// kernel: tpu_custom_call.1
$region0: #{tpu_custom_call.1}
  #allocation0 [shape = 'u32[]', space=smem, size = 0x4, offset = 0x4, fixed_abs, tag = 'smem constant byte address 0x4 - core index']
  #allocation1 [shape = 'u32[144,128]{1,0:T(1,128)}', space=vmem, size = 0x12000, scoped, tag = 'internal scratch']
  %s0 = inlined_call_operand.vmem [shape: f32[6,256], index: 0, kind: input, shape index: {}]
  %s1 = inlined_call_operand.vmem [shape: f32[6,1], index: 1, kind: input, shape index: {}]
  %s2 = inlined_call_operand.vmem [shape: f32[6,1], index: 2, kind: input, shape index: {}]
  %s3 = inlined_call_operand.hbm [shape: f32[6,256], index: 3, kind: output, shape index: {}]
  %s4 = sld [smem:[#allocation0]]
  $region22: #{tpu_custom_call.1} parent=0
    _
  %s6 = ssub.s32 1, %s4
  %s7 = scalar_select 0, %s6, %s4
  $region1: #{tpu_custom_call.1} parent=0
    #allocation2 [shape = 'u8[8192]{0}', space=vmem, size = 0x2000, scoped, tag = 'output window, operand 0, single buffered']
    #allocation3 [shape = 's32[1]{0}', space=sflag, size = 0x4, scoped, tag = 'scoped memory for tpu_custom_call.1']
    %8 = vsyncpa [#allocation3], 0
    // Predicated region
    $region2: #{tpu_custom_call.1} parent=1 // pred_check
      _
    $region3: #{tpu_custom_call.1} parent=1 // pred_check_branch
      %10 = sbr.rel (0) target = $region5
    $region4: #{tpu_custom_call.1} parent=1 // pred_region
      _
    $region5: #{tpu_custom_call.1} parent=1 // pred_fallthru
      _
    // Predicated region
    $region6: #{tpu_custom_call.1} parent=1 // pred_check
      _
    $region7: #{tpu_custom_call.1} parent=1 // pred_check_branch
      %12 = sbr.rel (0) target = $region9
    $region8: #{tpu_custom_call.1} parent=1 // pred_region
      _
    $region9: #{tpu_custom_call.1} parent=1 // pred_fallthru
      _
    // Predicated region
    $region10: #{tpu_custom_call.1} parent=1 // pred_check
      _
    $region11: #{tpu_custom_call.1} parent=1 // pred_check_branch
      %14 = sbr.rel (0) target = $region13
    $region12: #{tpu_custom_call.1} parent=1 // pred_region
      _
    $region13: #{tpu_custom_call.1} parent=1 // pred_fallthru
      _
    %s15 = smul.u32 0, 6
    %s16 = scalar_lea.vmem %s1, %s15
    %v17 = vld [vmem:[%s16] sm:$0x3f]
    %s18 = scalar_lea.vmem %s2, %s15
    %v19 = vld [vmem:[%s18] sm:$0x3f]
    %v20 = vld [vmem:[%s0] sm:$0x3f]
    %v21 = vld [vmem:[%s0 + $0x8] sm:$0x3f]
    %23 = vset.pattern.permute.xlu0 0
    %24 = vperm.xlu0 %23, %v17
    %v25 = vpop.permute.xlu0 %24
    %v27 = vmul.f32 %v20, %v25
    %v28 = vmul.f32 %v21, %v25
    %30 = vset.pattern.permute.xlu0 0
    %31 = vperm.xlu0 %30, %v19
    %v32 = vpop.permute.xlu0 %31
    %v34 = vadd.f32 %v27, %v32
    %v35 = vadd.f32 %v28, %v32
    %36 = vst [vmem:[#allocation2] sm:$0x3f] %v34
    %37 = vst [vmem:[#allocation2 + $0x8] sm:$0x3f] %v35
    // Predicated region
    $region14: #{tpu_custom_call.1} parent=1 // pred_check
      _
    $region15: #{tpu_custom_call.1} parent=1 // pred_check_branch
      %39 = sbr.rel (0) target = $region17
    $region16: #{tpu_custom_call.1} parent=1 // pred_region
      %s41 = ssub.s32 256, 256
      %42 = vsyncadd [#allocation3], %s41
      %s44 = sshll.u32 [#allocation2], 4
      %s45 = int_to_ptr.vmem [resolvable:$true] %s44
      %47 = dma.vmem_to_hbm [thread:$0]  %s45, 256, %s3, [#allocation3]
    $region17: #{tpu_custom_call.1} parent=1 // pred_fallthru
      _
    // Predicated region
    $region18: #{tpu_custom_call.1} parent=1 // pred_check
      _
    $region19: #{tpu_custom_call.1} parent=1 // pred_check_branch
      %49 = sbr.rel (0) target = $region21
    $region20: #{tpu_custom_call.1} parent=1 // pred_region
      %50 = dma.done [#allocation3], 256
    $region21: #{tpu_custom_call.1} parent=1 // pred_fallthru
      _
    %51 = vsyncpa [#allocation3], 1

</llo_original>
